<compile_context>
chip_gen: v7x
topology: tpu7x:2x2x1
jax: 0.10.0
libtpu: 0.0.40
codegen_flags: <defaults>
</compile_context>

<pallas_src>
import functools
import math

import numpy as np
import jax
import jax.numpy as jnp
from jax.experimental import pallas as pl
from jax.experimental.pallas import tpu as pltpu

GRANITEVISION_PIXEL_VALUE_DIM = 5

_VMEM_LIMIT = 48 * 1024 * 1024  # explicit scoped-VMEM cap (safe on v7x's 64 MiB)


def _mosaic_params(dims):
    return pltpu.CompilerParams(dimension_semantics=dims,
                                vmem_limit_bytes=_VMEM_LIMIT)


# ----------------------------------------------------------------------------
# Tiling helpers (never fall back to an arbitrary full dimension: either pick
# an aligned divisor near the target or pad the dimension up).
# ----------------------------------------------------------------------------

def _round_up(x, m):
    return ((x + m - 1) // m) * m


def _choose_tile(dim, target, align):
    """Return (tile, padded_dim).  `target` must be a multiple of `align`."""
    if dim <= target:
        return dim, dim                      # full-extent block is always legal
    lo = max(align, (target // 2 // align) * align)
    for t in range(target, lo - 1, -align):  # aligned divisor near the target
        if dim % t == 0:
            return t, dim
    return target, _round_up(dim, target)    # otherwise zero-pad to the target


# ----------------------------------------------------------------------------
# Tiled linear kernel: out = act(x @ w + b) [+ residual]
# ----------------------------------------------------------------------------

def _linear_kernel(*refs, activation, has_bias, has_residual):
    x_ref, w_ref = refs[0], refs[1]
    idx = 2
    b_ref = r_ref = None
    if has_bias:
        b_ref = refs[idx]; idx += 1
    if has_residual:
        r_ref = refs[idx]; idx += 1
    o_ref = refs[idx]
    acc_ref = refs[idx + 1]

    k = pl.program_id(2)

    @pl.when(k == 0)
    def _():
        acc_ref[...] = jnp.zeros_like(acc_ref)

    # bf16 operands into the MXU; f32 accumulation.
    acc_ref[...] += jnp.dot(x_ref[...], w_ref[...],
                            preferred_element_type=jnp.float32)

    @pl.when(k == pl.num_programs(2) - 1)
    def _():
        acc = acc_ref[...]
        if has_bias:
            acc = acc + b_ref[...].astype(jnp.float32)
        if activation == "gelu":
            # TODO(synk): tanh-approx GELU; HF projector uses exact erf GELU (~1e-3 diff).
            c = jnp.float32(math.sqrt(2.0 / math.pi))
            acc = 0.5 * acc * (1.0 + jnp.tanh(c * (acc + 0.044715 * acc * acc * acc)))
        elif activation == "quick_gelu":
            acc = acc * jax.nn.sigmoid(1.702 * acc)
        if has_residual:
            acc = acc + r_ref[...].astype(jnp.float32)
        o_ref[...] = acc.astype(o_ref.dtype)


def pallas_linear(x, w, b=None, activation="none", residual=None,
                  tm=512, tn=512, tk=1024):
    """x: (M, K), w: (K, N) (already transposed vs. torch Linear), b: (N,) or None.
    residual: optional (M, N) tensor added in the epilogue."""
    M, K = x.shape
    Kw, N = w.shape
    assert K == Kw
    tm, Mp = _choose_tile(M, tm, 8)
    tn, Np = _choose_tile(N, tn, 128)
    tk, Kp = _choose_tile(K, tk, 128)

    if Mp != M or Kp != K:
        x = jnp.pad(x, ((0, Mp - M), (0, Kp - K)))
    if Kp != K or Np != N:
        w = jnp.pad(w, ((0, Kp - K), (0, Np - N)))
    if b is not None and Np != N:
        b = jnp.pad(b, ((0, Np - N),))
    if residual is not None and (Mp != M or Np != N):
        residual = jnp.pad(residual, ((0, Mp - M), (0, Np - N)))

    grid = (Mp // tm, Np // tn, Kp // tk)

    in_specs = [
        pl.BlockSpec((tm, tk), lambda i, j, k: (i, k)),
        pl.BlockSpec((tk, tn), lambda i, j, k: (k, j)),
    ]
    args = [x, w]
    if b is not None:
        in_specs.append(pl.BlockSpec((1, tn), lambda i, j, k: (0, j)))
        args.append(b.reshape(1, Np))
    if residual is not None:
        in_specs.append(pl.BlockSpec((tm, tn), lambda i, j, k: (i, j)))
        args.append(residual)

    kernel = functools.partial(
        _linear_kernel, activation=activation,
        has_bias=b is not None, has_residual=residual is not None)

    out = pl.pallas_call(
        kernel,
        out_shape=jax.ShapeDtypeStruct((Mp, Np), x.dtype),
        grid_spec=pltpu.PrefetchScalarGridSpec(
            num_scalar_prefetch=0,
            grid=grid,
            in_specs=in_specs,
            out_specs=pl.BlockSpec((tm, tn), lambda i, j, k: (i, j)),
            scratch_shapes=[pltpu.VMEM((tm, tn), jnp.float32)],
        ),
        compiler_params=_mosaic_params(("parallel", "parallel", "arbitrary")),
    )(*args)

    if Mp != M or Np != N:
        out = out[:M, :N]
    return out


# ----------------------------------------------------------------------------
# Tiled layernorm kernel (rows tiled, feature dim whole; f32 internal math)
# ----------------------------------------------------------------------------

def _layernorm_kernel(x_ref, g_ref, b_ref, o_ref, *, eps):
    x = x_ref[...].astype(jnp.float32)
    mean = jnp.mean(x, axis=-1, keepdims=True)
    xc = x - mean
    var = jnp.mean(xc * xc, axis=-1, keepdims=True)
    inv = jax.lax.rsqrt(var + eps)
    y = xc * inv * g_ref[...].astype(jnp.float32) + b_ref[...].astype(jnp.float32)
    o_ref[...] = y.astype(o_ref.dtype)


def pallas_layernorm(x, g, b, eps=1e-5, tm=256):
    M, D = x.shape
    tm, Mp = _choose_tile(M, tm, 8)
    if Mp != M:
        x = jnp.pad(x, ((0, Mp - M), (0, 0)))
    kernel = functools.partial(_layernorm_kernel, eps=eps)
    out = pl.pallas_call(
        kernel,
        out_shape=jax.ShapeDtypeStruct((Mp, D), x.dtype),
        grid_spec=pltpu.PrefetchScalarGridSpec(
            num_scalar_prefetch=0,
            grid=(Mp // tm,),
            in_specs=[
                pl.BlockSpec((tm, D), lambda i: (i, 0)),
                pl.BlockSpec((1, D), lambda i: (0, 0)),
                pl.BlockSpec((1, D), lambda i: (0, 0)),
            ],
            out_specs=pl.BlockSpec((tm, D), lambda i: (i, 0)),
        ),
        compiler_params=_mosaic_params(("parallel",)),
    )(x, g.reshape(1, D), b.reshape(1, D))
    return out[:M] if Mp != M else out


# ----------------------------------------------------------------------------
# Flash-attention kernel (online softmax, padded-key masking, scale pre-folded)
# ----------------------------------------------------------------------------

def _flash_attn_kernel(q_ref, k_ref, v_ref, o_ref, m_ref, l_ref, acc_ref,
                       *, s_valid, tk, need_mask):
    ki = pl.program_id(2)

    @pl.when(ki == 0)
    def _():
        m_ref[...] = jnp.full_like(m_ref, -jnp.inf)
        l_ref[...] = jnp.zeros_like(l_ref)
        acc_ref[...] = jnp.zeros_like(acc_ref)

    q = q_ref[...]          # scale already folded into the QKV weight
    k = k_ref[...]
    v = v_ref[...]

    s = jax.lax.dot_general(q, k, (((1,), (1,)), ((), ())),
                            preferred_element_type=jnp.float32)      # (tq, tk)
    if need_mask:
        kpos = ki * tk + jax.lax.broadcasted_iota(jnp.int32, s.shape, 1)
        s = jnp.where(kpos < s_valid, s, jnp.float32(-1e30))

    m_prev = m_ref[...]
    m_new = jnp.maximum(m_prev, jnp.max(s, axis=-1, keepdims=True))
    alpha = jnp.exp(m_prev - m_new)
    p = jnp.exp(s - m_new)

    l_ref[...] = alpha * l_ref[...] + jnp.sum(p, axis=-1, keepdims=True)
    acc_ref[...] = alpha * acc_ref[...] + jnp.dot(
        p.astype(v.dtype), v, preferred_element_type=jnp.float32)
    m_ref[...] = m_new

    @pl.when(ki == pl.num_programs(2) - 1)
    def _():
        inv_l = pl.reciprocal(l_ref[...], approx=True)
        o_ref[...] = (acc_ref[...] * inv_l).astype(o_ref.dtype)


def pallas_flash_attention(q, k, v, *, s_valid):
    """q, k, v: (B*H, S_pad, Dh); key positions >= s_valid are masked out."""
    BH, S, Dh = q.shape
    tq = 128 if (S >= 128 and S % 128 == 0) else S
    tk = tq
    grid = (BH, S // tq, S // tk)
    kernel = functools.partial(_flash_attn_kernel, s_valid=s_valid, tk=tk,
                               need_mask=(s_valid < S))
    return pl.pallas_call(
        kernel,
        out_shape=jax.ShapeDtypeStruct((BH, S, Dh), q.dtype),
        grid_spec=pltpu.PrefetchScalarGridSpec(
            num_scalar_prefetch=0,
            grid=grid,
            in_specs=[
                pl.BlockSpec((None, tq, Dh), lambda b, qi, ki: (b, qi, 0)),
                pl.BlockSpec((None, tk, Dh), lambda b, qi, ki: (b, ki, 0)),
                pl.BlockSpec((None, tk, Dh), lambda b, qi, ki: (b, ki, 0)),
            ],
            out_specs=pl.BlockSpec((None, tq, Dh), lambda b, qi, ki: (b, qi, 0)),
            scratch_shapes=[
                pltpu.VMEM((tq, 1), jnp.float32),    # running max m
                pltpu.VMEM((tq, 1), jnp.float32),    # running denom l
                pltpu.VMEM((tq, Dh), jnp.float32),   # output accumulator
            ],
        ),
        compiler_params=_mosaic_params(("parallel", "parallel", "arbitrary")),
    )(q, k, v)


# ----------------------------------------------------------------------------
# CLIP-style vision tower (glue in JAX, compute in the Pallas kernels above)
# ----------------------------------------------------------------------------

def clip_encoder_layer(x, lp, num_heads, s_valid):
    N, S, D = x.shape                       # S is the padded sequence length
    Dh = D // num_heads
    x_flat = x.reshape(N * S, D)

    # ---- attention block ----
    h = pallas_layernorm(x_flat, lp["ln1_g"], lp["ln1_b"])
    qkv = pallas_linear(h, lp["qkv_w"], lp["qkv_b"])            # fused Q|K|V, (N*S, 3D)

    # TODO(synk): head split/merge kept as XLA transposes; packed-head (128-lane)
    # BlockSpec indexing directly into qkv would remove these two passes.
    qkv = qkv.reshape(N, S, 3, num_heads, Dh)
    qkv = jnp.transpose(qkv, (2, 0, 3, 1, 4))                   # (3, N, H, S, Dh)
    q = qkv[0].reshape(N * num_heads, S, Dh)
    k = qkv[1].reshape(N * num_heads, S, Dh)
    v = qkv[2].reshape(N * num_heads, S, Dh)

    attn = pallas_flash_attention(q, k, v, s_valid=s_valid)     # (N*H, S, Dh)
    attn = attn.reshape(N, num_heads, S, Dh).transpose(0, 2, 1, 3).reshape(N * S, D)

    # o_proj with residual add fused into the kernel epilogue.
    x_flat = pallas_linear(attn, lp["o_w"], lp["o_b"], residual=x_flat)

    # ---- MLP block ----
    h = pallas_layernorm(x_flat, lp["ln2_g"], lp["ln2_b"])
    h = pallas_linear(h, lp["fc1_w"], lp["fc1_b"], activation="quick_gelu")
    x_flat = pallas_linear(h, lp["fc2_w"], lp["fc2_b"], residual=x_flat)

    return x_flat.reshape(N, S, D)


def vision_tower(pixel_values, params, cfg):
    """pixel_values: (N_crops, C, H, W) NCHW. Returns (captured_hidden_states, S)."""
    dtype = params["patch_w"].dtype
    pixel_values = pixel_values.astype(dtype)
    N, C, H, W = pixel_values.shape
    P, D = cfg["patch_size"], cfg["hidden"]
    nh, nw = H // P, W // P

    # Patch-embedding conv (stride==kernel==P, bias=False) as a bias-free matmul.
    patches = pixel_values.reshape(N, C, nh, P, nw, P)
    patches = patches.transpose(0, 2, 4, 1, 3, 5).reshape(N * nh * nw, C * P * P)
    emb = pallas_linear(patches, params["patch_w"])             # no bias input
    emb = emb.reshape(N, nh * nw, D)

    cls = jnp.broadcast_to(params["class_emb"][None, None, :], (N, 1, D)).astype(dtype)
    x = jnp.concatenate([cls, emb], axis=1) + params["pos_emb"][None, :, :]

    S = x.shape[1]
    # Pad the sequence once to a tile-friendly length (multiple of 128, or 8 at
    # tiny sizes).  Padded keys are masked inside attention; padded rows never
    # contaminate valid rows (all other ops are row-wise) and are sliced off.
    t_att = 128 if S >= 128 else _round_up(S, 8)
    S_pad = _round_up(S, t_att)
    if S_pad != S:
        x = jnp.pad(x, ((0, 0), (0, S_pad - S), (0, 0)))

    x = pallas_layernorm(x.reshape(N * S_pad, D),
                         params["pre_ln_g"], params["pre_ln_b"]).reshape(N, S_pad, D)

    # Only retain the hidden state(s) actually requested by vision_feature_layer.
    L = len(params["layers"])
    vfl = cfg["vision_feature_layer"]
    want = {vfl % (L + 1)} if isinstance(vfl, int) else {i % (L + 1) for i in vfl}
    captured = {}
    if 0 in want:
        captured[0] = x
    for li, lp in enumerate(params["layers"]):
        x = clip_encoder_layer(x, lp, cfg["heads"], s_valid=S)
        if (li + 1) in want:
            captured[li + 1] = x
    return captured, S


# ----------------------------------------------------------------------------
# anyres helpers (pure Python on static shapes)
# ----------------------------------------------------------------------------

def select_best_resolution(original_size, possible_resolutions):
    orig_h, orig_w = original_size
    best_fit, max_eff, min_waste = None, 0, float("inf")
    for (h, w) in possible_resolutions:
        scale = min(w / orig_w, h / orig_h)
        dn_w, dn_h = int(orig_w * scale), int(orig_h * scale)
        eff = min(dn_w * dn_h, orig_w * orig_h)
        waste = (w * h) - eff
        if eff > max_eff or (eff == max_eff and waste < min_waste):
            max_eff, min_waste, best_fit = eff, waste, (h, w)
    return best_fit


def get_anyres_image_grid_shape(image_size, grid_pinpoints, patch_size):
    h, w = select_best_resolution(image_size, grid_pinpoints)
    return h // patch_size, w // patch_size


# ----------------------------------------------------------------------------
# QEffLlavaNextEncoderWrapper.forward equivalent
# ----------------------------------------------------------------------------

def llava_next_encoder_forward(params, cfg, pixel_values, image_sizes):
    if pixel_values.ndim == GRANITEVISION_PIXEL_VALUE_DIM:
        pixel_values_new = pixel_values[0]            # squeeze(0)
    else:
        pixel_values_new = pixel_values

    captured, s_orig = vision_tower(pixel_values_new, params, cfg)

    L = len(params["layers"])
    vfl = cfg["vision_feature_layer"]
    if isinstance(vfl, int):
        selected = captured[vfl % (L + 1)]
    else:
        selected = jnp.concatenate([captured[i % (L + 1)] for i in vfl], axis=-1)

    selected = selected[:, :s_orig]                   # drop sequence padding

    strategy = cfg["vision_feature_select_strategy"]
    if strategy == "default":
        selected = selected[:, 1:]                    # drop CLS token
    elif strategy == "full":
        pass
    else:
        raise ValueError(f"Unexpected select feature strategy: {strategy}")

    # Multi-modal projector: linear -> gelu -> linear (tiled Pallas matmuls).
    N, Sp, D = selected.shape
    h = pallas_linear(selected.reshape(N * Sp, D),
                      params["proj_l1_w"], params["proj_l1_b"], activation="gelu")
    h = pallas_linear(h, params["proj_l2_w"], params["proj_l2_b"])
    Dt = h.shape[-1]
    image_features = h.reshape(N, Sp, Dt)

    # torch.split(image_features, [N], dim=0) -> single chunk.
    splits = [image_features]
    new_image_features = []
    for image_idx, image_feature in enumerate(splits):
        if image_feature.shape[0] > 1:
            base_image_feature = image_feature[0]
            image_feature = image_feature[1:]
            height = width = cfg["image_size"] // cfg["patch_size"]
            orig = [int(v) for v in np.asarray(image_sizes[image_idx]).tolist()]
            nph, npw = get_anyres_image_grid_shape(
                tuple(orig), cfg["image_grid_pinpoints"], cfg["image_size"])

            image_feature = image_feature.reshape(nph, npw, height, width, -1)
            image_feature = jnp.transpose(image_feature, (4, 0, 2, 1, 3))        # (Dt, nph, h, npw, w)
            image_feature = image_feature.reshape(Dt, nph * height, npw, width)  # flatten(1, 2)
            image_feature = image_feature.reshape(Dt, nph * height, npw * width) # flatten(2, 3)

            original_height, original_width = orig
            current_height, current_width = image_feature.shape[1:]
            scale_factor = current_width / original_width
            new_height = int(round(original_height * scale_factor, 7))
            padding = (current_height - new_height) // 2
            image_feature = image_feature[:, padding:current_height - padding, :]

            newline = jnp.broadcast_to(
                params["image_newline"][:, None, None],
                (image_feature.shape[0], image_feature.shape[1], 1),
            ).astype(image_feature.dtype)
            image_feature = jnp.concatenate([image_feature, newline], axis=-1)
            image_feature = image_feature.reshape(Dt, -1).T                      # flatten(1,2).transpose(0,1)
            image_feature = jnp.concatenate([base_image_feature, image_feature], axis=0)
        else:
            image_feature = image_feature[0]
            image_feature = jnp.concatenate(
                [image_feature, params["image_newline"][None, :]], axis=0)
        new_image_features.append(image_feature)

    image_features = jnp.concatenate(new_image_features, axis=0)
    return image_features[None]                        # unsqueeze(0)


# ----------------------------------------------------------------------------
# Deterministic synthetic parameters (bf16 operands, QKV fused, scale folded)
# ----------------------------------------------------------------------------

def init_params(key, cfg):
    D, I, Dt = cfg["hidden"], cfg["intermediate"], cfg["text_hidden"]
    C, P = cfg["channels"], cfg["patch_size"]
    Dh = D // cfg["heads"]
    attn_scale = 1.0 / math.sqrt(Dh)
    num_pos = (cfg["image_size"] // P) ** 2 + 1
    keys = iter(jax.random.split(key, 256))
    dtype = jnp.bfloat16

    def wf(shape, scale=0.02):                    # f32 draw (cast after folding)
        return scale * jax.random.normal(next(keys), shape)

    def w(shape, scale=0.02):
        return wf(shape, scale).astype(dtype)

    params = {
        "patch_w": w((C * P * P, D)),
        "class_emb": w((D,)),
        "pos_emb": w((num_pos, D)),
        "pre_ln_g": jnp.ones((D,), jnp.float32),
        "pre_ln_b": jnp.zeros((D,), jnp.float32),
        "layers": [],
        "proj_l1_w": w((D, Dt)), "proj_l1_b": jnp.zeros((Dt,), jnp.float32),
        "proj_l2_w": w((Dt, Dt)), "proj_l2_b": jnp.zeros((Dt,), jnp.float32),
        "image_newline": w((Dt,)),
    }
    for _ in range(cfg["layers"]):
        # 1/sqrt(Dh) folded into the Q columns (weights AND bias) of fused QKV.
        q_w = wf((D, D)) * attn_scale
        k_w, v_w = wf((D, D)), wf((D, D))
        q_b = jnp.zeros((D,), jnp.float32) * attn_scale
        k_b = jnp.zeros((D,), jnp.float32)
        v_b = jnp.zeros((D,), jnp.float32)
        params["layers"].append(dict(
            ln1_g=jnp.ones((D,), jnp.float32), ln1_b=jnp.zeros((D,), jnp.float32),
            qkv_w=jnp.concatenate([q_w, k_w, v_w], axis=1).astype(dtype),   # (D, 3D)
            qkv_b=jnp.concatenate([q_b, k_b, v_b], axis=0),                 # (3D,) f32
            o_w=w((D, D)), o_b=jnp.zeros((D,), jnp.float32),
            ln2_g=jnp.ones((D,), jnp.float32), ln2_b=jnp.zeros((D,), jnp.float32),
            fc1_w=w((D, I)), fc1_b=jnp.zeros((I,), jnp.float32),
            fc2_w=w((I, D)), fc2_b=jnp.zeros((D,), jnp.float32),
        ))
    return params


if __name__ == "__main__":
    cfg = dict(
        image_size=16, patch_size=8, channels=3,
        hidden=32, heads=2, layers=2, intermediate=64,
        text_hidden=32,
        image_grid_pinpoints=[[16, 16], [16, 32], [32, 16], [32, 32]],
        vision_feature_layer=-2,
        vision_feature_select_strategy="default",
    )

    key = jax.random.PRNGKey(0)
    kp, kx = jax.random.split(key)
    params = init_params(kp, cfg)

    # 1 image, original size 32x32 -> best pinpoint (32,32) -> 2x2 grid of crops
    # plus the base crop => 5 crops of (3, 16, 16).
    num_crops = 1 + 2 * 2
    pixel_values = jax.random.normal(
        kx, (1, num_crops, cfg["channels"], cfg["image_size"], cfg["image_size"]),
        dtype=jnp.float32,
    )
    image_sizes = np.array([[32, 32]], dtype=np.int32)

    out = llava_next_encoder_forward(params, cfg, pixel_values, image_sizes)
    out = jax.block_until_ready(out)

    # base crop tokens (2*2=4) + 4 sub-crops rearranged to 4x4 grid with a
    # newline column appended (4 rows * 5 cols = 20) => 24 tokens of dim 32.
    assert out.shape == (1, 24, cfg["text_hidden"]), out.shape
    assert bool(jnp.all(jnp.isfinite(out.astype(jnp.float32))))
    print("KERNEL_OK")
</pallas_src>

<mosaic_0001>
module attributes {stable_mosaic.version = 11 : i64} {
  func.func @_linear_kernel(%arg0: i32, %arg1: i32, %arg2: i32, %arg3: memref<20x192xbf16, #tpu.memory_space<vmem>>, %arg4: memref<192x32xbf16, #tpu.memory_space<vmem>>, %arg5: memref<20x32xbf16, #tpu.memory_space<vmem>>, %arg6: memref<20x32xf32, #tpu.memory_space<vmem>>) attributes {dimension_semantics = [#tpu.dimension_semantics<parallel>, #tpu.dimension_semantics<parallel>, #tpu.dimension_semantics<arbitrary>], iteration_bounds = array<i64: 1, 1, 1>, scalar_prefetch = 0 : i64, scratch_operands = 1 : i64, tpu.core_type = #tpu.core_type<tc>, window_params = [{transform_indices = @transform_0, window_bounds = array<i64: 20, 192>}, {transform_indices = @transform_1, window_bounds = array<i64: 192, 32>}, {transform_indices = @transform_2, window_bounds = array<i64: 20, 32>}]} {
    %c0_i32 = arith.constant 0 : i32
    %0 = arith.cmpi eq, %arg2, %c0_i32 : i32
    %1 = arith.extui %0 : i1 to i32
    %c0_i32_0 = arith.constant 0 : i32
    %2 = arith.cmpi ne, %1, %c0_i32_0 : i32
    scf.if %2 {
      %cst_10 = arith.constant 0.000000e+00 : f32
      %12 = vector.broadcast %cst_10 : f32 to vector<20x32xf32>
      %c0_11 = arith.constant 0 : index
      %c0_12 = arith.constant 0 : index
      %13 = vector.load %arg6[%c0_11, %c0_12] : memref<20x32xf32, #tpu.memory_space<vmem>>, vector<20x32xf32>
      tpu.vector_store %arg6[%c0_11, %c0_12], %12 {strides = array<i32>} : memref<20x32xf32, #tpu.memory_space<vmem>>, vector<20x32xf32>,
    } else {
    }
    %c0 = arith.constant 0 : index
    %c0_1 = arith.constant 0 : index
    %3 = vector.load %arg6[%c0, %c0_1] : memref<20x32xf32, #tpu.memory_space<vmem>>, vector<20x32xf32>
    %c0_2 = arith.constant 0 : index
    %c0_3 = arith.constant 0 : index
    %4 = vector.load %arg3[%c0_2, %c0_3] : memref<20x192xbf16, #tpu.memory_space<vmem>>, vector<20x192xbf16>
    %c0_4 = arith.constant 0 : index
    %c0_5 = arith.constant 0 : index
    %5 = vector.load %arg4[%c0_4, %c0_5] : memref<192x32xbf16, #tpu.memory_space<vmem>>, vector<192x32xbf16>
    %cst = arith.constant dense<0.000000e+00> : vector<20x32xf32>
    %6 = tpu.matmul %4, %5, %cst {dimension_numbers = #tpu.dot_dimension_numbers<[1], [0], [0], [1], [0, 0, 1, 1], [], []>} : vector<20x192xbf16>, vector<192x32xbf16>, vector<20x32xf32> -> vector<20x32xf32>
    %7 = arith.addf %3, %6 : vector<20x32xf32>
    %c0_6 = arith.constant 0 : index
    %c0_7 = arith.constant 0 : index
    %8 = vector.load %arg6[%c0_6, %c0_7] : memref<20x32xf32, #tpu.memory_space<vmem>>, vector<20x32xf32>
    tpu.vector_store %arg6[%c0_6, %c0_7], %7 {strides = array<i32>} : memref<20x32xf32, #tpu.memory_space<vmem>>, vector<20x32xf32>,
    %c0_i32_8 = arith.constant 0 : i32
    %9 = arith.cmpi eq, %arg2, %c0_i32_8 : i32
    %10 = arith.extui %9 : i1 to i32
    %c0_i32_9 = arith.constant 0 : i32
    %11 = arith.cmpi ne, %10, %c0_i32_9 : i32
    scf.if %11 {
      %c0_10 = arith.constant 0 : index
      %c0_11 = arith.constant 0 : index
      %12 = vector.load %arg6[%c0_10, %c0_11] : memref<20x32xf32, #tpu.memory_space<vmem>>, vector<20x32xf32>
      %13 = arith.truncf %12 : vector<20x32xf32> to vector<20x32xbf16>
      %c0_12 = arith.constant 0 : index
      %c0_13 = arith.constant 0 : index
      %14 = vector.load %arg5[%c0_12, %c0_13] : memref<20x32xbf16, #tpu.memory_space<vmem>>, vector<20x32xbf16>
      tpu.vector_store %arg5[%c0_12, %c0_13], %13 {strides = array<i32>} : memref<20x32xbf16, #tpu.memory_space<vmem>>, vector<20x32xbf16>,
    } else {
    }
    return
  }
  func.func @transform_0(%arg0: i32, %arg1: i32, %arg2: i32) -> (i32, i32) {
    %c0_i32 = arith.constant 0 : i32
    return %arg0, %arg2 : i32, i32
  }
  func.func @transform_1(%arg0: i32, %arg1: i32, %arg2: i32) -> (i32, i32) {
    %c0_i32 = arith.constant 0 : i32
    return %arg2, %arg1 : i32, i32
  }
  func.func @transform_2(%arg0: i32, %arg1: i32, %arg2: i32) -> (i32, i32) {
    %c0_i32 = arith.constant 0 : i32
    return %arg0, %arg1 : i32, i32
  }
}

</mosaic_0001>

<llo_original>
// kernel: tpu_custom_call.1
$region0: #{tpu_custom_call.1}
  #allocation0 [shape = 'u32[]', space=smem, size = 0x4, offset = 0x4, fixed_abs, tag = 'smem constant byte address 0x4 - core index']
  #allocation1 [shape = 'u32[144,128]{1,0:T(1,128)}', space=vmem, size = 0x12000, scoped, tag = 'internal scratch']
  #allocation2 [shape = 'f32[20,32]{1,0:T(8,128)}', space=vmem, size = 0x3000, scoped, tag = 'scratch operand']
  %s0 = inlined_call_operand.vmem [shape: bf16[20,192], index: 0, kind: input, shape index: {}]
  %s1 = inlined_call_operand.vmem [shape: bf16[192,32], index: 1, kind: input, shape index: {}]
  %s2 = inlined_call_operand.hbm [shape: bf16[20,32], index: 2, kind: output, shape index: {}]
  %s3 = sld [smem:[#allocation0]]
  $region26: #{tpu_custom_call.1} parent=0
    _
  %s5 = ssub.s32 1, %s3
  %s6 = scalar_select 0, %s5, %s3
  $region1: #{tpu_custom_call.1} parent=0
    #allocation3 [shape = 'u8[6144]{0}', space=vmem, size = 0x1800, scoped, tag = 'output window, operand 0, single buffered']
    #allocation4 [shape = 's32[1]{0}', space=sflag, size = 0x4, scoped, tag = 'scoped memory for tpu_custom_call.1']
    %7 = vsyncpa [#allocation4], 0
    // Predicated region
    $region2: #{tpu_custom_call.1} parent=1 // pred_check
      _
    $region3: #{tpu_custom_call.1} parent=1 // pred_check_branch
      %9 = sbr.rel (0) target = $region5
    $region4: #{tpu_custom_call.1} parent=1 // pred_region
      _
    $region5: #{tpu_custom_call.1} parent=1 // pred_fallthru
      _
    // Predicated region
    $region6: #{tpu_custom_call.1} parent=1 // pred_check
      _
    $region7: #{tpu_custom_call.1} parent=1 // pred_check_branch
      %11 = sbr.rel (0) target = $region9
    $region8: #{tpu_custom_call.1} parent=1 // pred_region
      _
    $region9: #{tpu_custom_call.1} parent=1 // pred_fallthru
      _
    %p13 = scmp.eq.s32.totalorder 0, 0
    // Predicated region
    $region10: #{tpu_custom_call.1} parent=1 // pred_check
      %p14 = pneg %p13
    $region11: #{tpu_custom_call.1} parent=1 // pred_check_branch
      %16 = sbr.rel (%p14) target = $region13
    $region12: #{tpu_custom_call.1} parent=1 // pred_region
      %vm17 = vcmask 261120
      %18 = vst.msk [vmem:[#allocation2] sm:$0xff] %vm17, 0.0
      %19 = vst.msk [vmem:[#allocation2 + $0x8] sm:$0xff] %vm17, 0.0
      %vm20 = vcmask 257024
      %21 = vst.msk [vmem:[#allocation2 + $0x10] sm:$0xf] %vm20, 0.0
    $region13: #{tpu_custom_call.1} parent=1 // pred_fallthru
      _
    %v22 = vld [vmem:[#allocation2] sm:$0xff]
    %v23 = vld [vmem:[#allocation2 + $0x8] sm:$0xff]
    %v24 = vld [vmem:[#allocation2 + $0x10] sm:$0xf]
    %v25 = vld [vmem:[%s0] sm:$0xff]
    %v26 = vld [vmem:[%s0 + $0x8] sm:$0xff]
    %v27 = vld [vmem:[%s0 + $0x10] sm:$0x33]
    %v28 = vld [vmem:[%s1] sm:$0xf]
    %v29 = vld [vmem:[%s1 + $0x4] sm:$0xf]
    %v30 = vld [vmem:[%s1 + $0x8] sm:$0xf]
    %v31 = vld [vmem:[%s1 + $0xc] sm:$0xf]
    %v32 = vld [vmem:[%s1 + $0x10] sm:$0xf]
    %v33 = vld [vmem:[%s1 + $0x14] sm:$0xf]
    %v34 = vld [vmem:[%s1 + $0x18] sm:$0xf]
    %v35 = vld [vmem:[%s1 + $0x1c] sm:$0xf]
    %v36 = vld [vmem:[%s1 + $0x20] sm:$0xf]
    %v37 = vld [vmem:[%s1 + $0x24] sm:$0xf]
    %v38 = vld [vmem:[%s1 + $0x28] sm:$0xf]
    %v39 = vld [vmem:[%s1 + $0x2c] sm:$0xf]
    %v40 = vld [vmem:[%s1 + $0x30] sm:$0xf]
    %v41 = vld [vmem:[%s1 + $0x34] sm:$0xf]
    %v42 = vld [vmem:[%s1 + $0x38] sm:$0xf]
    %v43 = vld [vmem:[%s1 + $0x3c] sm:$0xf]
    %v44 = vld [vmem:[%s1 + $0x40] sm:$0xf]
    %v45 = vld [vmem:[%s1 + $0x44] sm:$0xf]
    %v46 = vld [vmem:[%s1 + $0x48] sm:$0xf]
    %v47 = vld [vmem:[%s1 + $0x4c] sm:$0xf]
    %v48 = vld [vmem:[%s1 + $0x50] sm:$0xf]
    %v49 = vld [vmem:[%s1 + $0x54] sm:$0xf]
    %v50 = vld [vmem:[%s1 + $0x58] sm:$0xf]
    %v51 = vld [vmem:[%s1 + $0x5c] sm:$0xf]
    %v55 = vunpack.c.l.b16 %v25
    %v56 = vunpack.c.h.b16 %v25
    %v57 = vunpack.c.l.b16 %v26
    %v58 = vunpack.c.h.b16 %v26
    %v59 = vunpack.c.l.b16 %v27
    %v60 = vunpack.c.h.b16 %v27
    %v61 = vpack.c.b16 %v57, %v55
    %v62 = vpack.c.b16 %v58, %v56
    %v63 = vpack.c.b16 %v59, %v59
    %v64 = vpack.c.b16 %v60, %v60
    %v91 = vunpack.c.l.b16 %v28
    %v92 = vunpack.c.l.b16 %v29
    %v93 = vunpack.c.l.b16 %v30
    %v94 = vunpack.c.l.b16 %v31
    %v95 = vunpack.c.l.b16 %v32
    %v96 = vunpack.c.l.b16 %v33
    %v97 = vunpack.c.l.b16 %v34
    %v98 = vunpack.c.l.b16 %v35
    %v99 = vunpack.c.l.b16 %v36
    %v100 = vunpack.c.l.b16 %v37
    %v101 = vunpack.c.l.b16 %v38
    %v102 = vunpack.c.l.b16 %v39
    %v103 = vunpack.c.l.b16 %v40
    %v104 = vunpack.c.l.b16 %v41
    %v105 = vunpack.c.l.b16 %v42
    %v106 = vunpack.c.l.b16 %v43
    %v107 = vunpack.c.l.b16 %v44
    %v108 = vunpack.c.l.b16 %v45
    %v109 = vunpack.c.l.b16 %v46
    %v110 = vunpack.c.l.b16 %v47
    %v111 = vunpack.c.l.b16 %v48
    %v112 = vunpack.c.l.b16 %v49
    %v113 = vunpack.c.l.b16 %v50
    %v114 = vunpack.c.l.b16 %v51
    %v115 = vpack.c.b16 %v92, %v91
    %v116 = vpack.c.b16 %v94, %v93
    %v117 = vpack.c.b16 %v96, %v95
    %v118 = vpack.c.b16 %v98, %v97
    %v119 = vpack.c.b16 %v100, %v99
    %v120 = vpack.c.b16 %v102, %v101
    %v121 = vpack.c.b16 %v104, %v103
    %v122 = vpack.c.b16 %v106, %v105
    %v123 = vpack.c.b16 %v108, %v107
    %v124 = vpack.c.b16 %v110, %v109
    %v125 = vpack.c.b16 %v112, %v111
    %v126 = vpack.c.b16 %v114, %v113
    %vm139 = vcmask 523264
    %v141 = vsel %vm139, %v62, 0
    %v144 = vsel %vm139, %v64, 0
    %146 = vmatprep.subr.bf16.mxu0 0
    %147 = vmatpush1.bf16.msra.mxu0 %v115
    %148 = vmatprep.subr.bf16.mxu0 0
    %149 = vmatpush1.bf16.msra.mxu0 %v116
    %150 = vmatprep.subr.bf16.mxu0 0
    %151 = vmatpush1.bf16.msra.mxu0 %v117
    %152 = vmatprep.subr.bf16.mxu0 0
    %153 = vmatpush1.bf16.msra.mxu0 %v118
    %154 = vmatprep.subr.bf16.mxu0 0
    %155 = vmatpush1.bf16.msra.mxu0 %v119
    %156 = vmatprep.subr.bf16.mxu0 0
    %157 = vmatpush1.bf16.msra.mxu0 %v120
    %158 = vmatprep.subr.bf16.mxu0 0
    %159 = vmatpush1.bf16.msra.mxu0 %v121
    %160 = vmatprep.subr.bf16.mxu0 0
    %161 = vmatpush1.bf16.msra.mxu0 %v122
    %162 = vmatprep.subr.bf16.mxu0 0
    %163 = vmatpush1.bf16.msra.mxu0 %v123
    %164 = vmatprep.subr.bf16.mxu0 0
    %165 = vmatpush1.bf16.msra.mxu0 %v124
    %166 = vmatprep.subr.bf16.mxu0 0
    %167 = vmatpush1.bf16.msra.mxu0 %v125
    %168 = vmatprep.subr.bf16.mxu0 0
    %169 = vmatpush1.bf16.msra.mxu0 %v126
    %170 = vmatprep.subr.bf16.mxu0 0
    %171 = vmatpush1.bf16.msra.mxu0 0
    %172 = vmatprep.subr.bf16.mxu0 0
    %173 = vmatpush1.bf16.msra.mxu0 0
    %174 = vmatprep.subr.bf16.mxu0 0
    %175 = vmatpush1.bf16.msra.mxu0 0
    %176 = vmatprep.subr.bf16.mxu0 0
    %177 = vmatpush1.bf16.msra.mxu0 0
    %178 = vmatprep.mubr.bf16.mxu0 %v141
    %179 = vmatmul.mubr.bf16.gmra.mrb[0].mxu0 %v61
    %v180 = vpop.f32.mrb[0].mxu0
    %v181 = vadd.f32 0.0, %v180
    %v182 = vpop.f32.mrb[0].mxu0
    %v183 = vpop.f32.mrb[0].mxu0
    %v184 = vadd.f32 0.0, %v183
    %v185 = vpop.f32.mrb[0].mxu0
    %186 = vmatprep.mubr.bf16.mxu0 %v144
    %187 = vmatmul.mubr.bf16.gmra.mrb[0].mxu0 %v63
    %v188 = vpop.f32.mrb[0].mxu0
    %v189 = vadd.f32 0.0, %v188
    %v190 = vpop.f32.mrb[0].mxu0
    %v191 = vpop.f32.mrb[0].mxu0
    %v192 = vpop.f32.mrb[0].mxu0
    %193 = vdwg.mxu0
    %v194 = vadd.f32 %v22, %v181
    %v195 = vadd.f32 %v23, %v184
    %v196 = vadd.f32 %v24, %v189
    %vm197 = vcmask 261120
    %198 = vst.msk [vmem:[#allocation2] sm:$0xff] %vm197, %v194
    %199 = vst.msk [vmem:[#allocation2 + $0x8] sm:$0xff] %vm197, %v195
    %vm200 = vcmask 257024
    %201 = vst.msk [vmem:[#allocation2 + $0x10] sm:$0xf] %vm200, %v196
    // Predicated region
    $region14: #{tpu_custom_call.1} parent=1 // pred_check
      %p202 = pneg %p13
    $region15: #{tpu_custom_call.1} parent=1 // pred_check_branch
      %204 = sbr.rel (%p202) target = $region17
    $region16: #{tpu_custom_call.1} parent=1 // pred_region
      %v205 = vld [vmem:[#allocation2] sm:$0xff]
      %v206 = vld [vmem:[#allocation2 + $0x8] sm:$0xff]
      %v207 = vld [vmem:[#allocation2 + $0x10] sm:$0xf]
      %v208 = vpack.c.bf16 %v206, %v205
      %v209 = vpack.c.bf16 %v207, %v207
      %v212 = vunpack.c.l.b16 %v208
      %v213 = vunpack.c.h.b16 %v208
      %v214 = vunpack.c.l.b16 %v209
      %v215 = vpack.c.b16 %v212, %v212
      %v216 = vpack.c.b16 %v213, %v213
      %v217 = vpack.c.b16 %v214, %v214
      %221 = vst.msk [vmem:[#allocation3] sm:$0xf] %vm200, %v215
      %222 = vst.msk [vmem:[#allocation3 + $0x4] sm:$0xf] %vm200, %v216
      %vm223 = vcmask 254976
      %224 = vst.msk [vmem:[#allocation3 + $0x8] sm:$0x3] %vm223, %v217
    $region17: #{tpu_custom_call.1} parent=1 // pred_fallthru
      _
    // Predicated region
    $region18: #{tpu_custom_call.1} parent=1 // pred_check
      _
    $region19: #{tpu_custom_call.1} parent=1 // pred_check_branch
      %226 = sbr.rel (0) target = $region21
    $region20: #{tpu_custom_call.1} parent=1 // pred_region
      %s228 = ssub.s32 192, 192
      %229 = vsyncadd [#allocation4], %s228
      %s230 = sshll.u32 [#allocation3], 4
      %s231 = int_to_ptr.vmem [resolvable:$true] %s230
      %236 = dma.vmem_to_hbm [thread:$0]  %s231, 192, %s2, [#allocation4], 64, 64, 4
    $region21: #{tpu_custom_call.1} parent=1 // pred_fallthru
      _
    // Predicated region
    $region22: #{tpu_custom_call.1} parent=1 // pred_check
      _
    $region23: #{tpu_custom_call.1} parent=1 // pred_check_branch
      %238 = sbr.rel (0) target = $region25
    $region24: #{tpu_custom_call.1} parent=1 // pred_region
      %239 = dma.done [#allocation4], 192
    $region25: #{tpu_custom_call.1} parent=1 // pred_fallthru
      _
    %240 = vsyncpa [#allocation4], 1

</llo_original>
